<compile_context>
chip_gen: v5e
topology: v5e:2x2
jax: 0.10.0
libtpu: 0.0.40
codegen_flags: <defaults>
</compile_context>

<pallas_src>
import jax
import jax.numpy as jnp
from jax.experimental import pallas as pl
from jax.experimental.pallas import tpu as pltpu

_LANE = 128
_SUB = 8
_CHUNK = _LANE * _SUB  # 1024: batch granularity (full (8,128) vreg tiles)


def mlp_kernel(w1_ref, b1_ref, w2_ref, b2_ref, x_ref, o_ref):
    # x_ref: (3, TR, 128) f32 VMEM block, feature-major, batch on (sublane, lane).
    # w1_ref (3,3), b1_ref (3,), w2_ref (3,2), b2_ref (2,) live in SMEM; scalar
    # reads are broadcast across full vregs (scalar * vreg) by the VPU.
    x0 = x_ref[0]            # (TR, 128)
    x1 = x_ref[1]
    x2 = x_ref[2]

    # Layer 1 (3 -> 3) + ReLU: unrolled K=3 contraction on the VPU (no MXU --
    # at K=3/N<=3 the MXU would be <1% utilized and only add latency).
    h = []
    for j in range(3):
        hj = (x0 * w1_ref[0, j]
              + x1 * w1_ref[1, j]
              + x2 * w1_ref[2, j]) + b1_ref[j]
        h.append(jnp.maximum(hj, 0.0))

    # Layer 2 (3 -> 2): unrolled contraction, direct lane-dense row stores.
    for j in range(2):
        yj = (h[0] * w2_ref[0, j]
              + h[1] * w2_ref[1, j]
              + h[2] * w2_ref[2, j]) + b2_ref[j]
        o_ref[j] = yj.astype(o_ref.dtype)


def _tile_and_pad(batch, tile_batch):
    """Pick a 1024-aligned batch tile and padded batch size; prefer >=2 steps."""
    b_pad = max(_CHUNK, ((batch + _CHUNK - 1) // _CHUNK) * _CHUNK)
    tb = min(int(tile_batch), b_pad)
    tb = max(_CHUNK, (tb // _CHUNK) * _CHUNK)          # defensive 128/8 alignment
    if b_pad // tb < 2 and b_pad >= 2 * _CHUNK:        # keep both TCs busy (v7x)
        tb = max(_CHUNK, (b_pad // 2 // _CHUNK) * _CHUNK)
    b_pad = ((b_pad + tb - 1) // tb) * tb
    return b_pad, tb


def nnmodel_forward_feature_major(x_fm, w1, b1, w2, b2, *, tile_batch=65536):
    """x_fm: (3, R, 128) f32 feature-major input (R*128 = padded batch).

    Returns (2, R, 128) f32 = relu(w1^T @ x + b1) composed with layer 2,
    evaluated per padded batch column.  Padded columns hold garbage
    (relu(b1) @ w2 + b2) and must be sliced off by the caller.
    """
    assert x_fm.shape[0] == 3 and x_fm.shape[2] == _LANE
    R = x_fm.shape[1]
    b_pad = R * _LANE
    _, tb = _tile_and_pad(b_pad, tile_batch)
    tb = min(tb, b_pad)
    tr = tb // _LANE                                   # multiple of 8
    grid = (R // tr,)

    return pl.pallas_call(
        mlp_kernel,
        out_shape=jax.ShapeDtypeStruct((2, R, _LANE), jnp.float32),
        grid=grid,
        in_specs=[
            pl.BlockSpec(memory_space=pltpu.MemorySpace.SMEM),   # w1 (3,3)
            pl.BlockSpec(memory_space=pltpu.MemorySpace.SMEM),   # b1 (3,)
            pl.BlockSpec(memory_space=pltpu.MemorySpace.SMEM),   # w2 (3,2)
            pl.BlockSpec(memory_space=pltpu.MemorySpace.SMEM),   # b2 (2,)
            pl.BlockSpec((3, tr, _LANE), lambda i: (0, i, 0)),   # x block
        ],
        out_specs=pl.BlockSpec((2, tr, _LANE), lambda i: (0, i, 0)),
        compiler_params=pltpu.CompilerParams(
            dimension_semantics=("parallel",)),
    )(w1, b1, w2, b2, x_fm)


def nnmodel_forward(x, w1, b1, w2, b2, *, tile_batch=65536):
    """x: (B, 3) f32.  w1: (3, 3) (in, out) = torch weight transposed, b1: (3,),
    w2: (3, 2) (in, out), b2: (2,).  Returns (B, 2) = relu(x @ w1 + b1) @ w2 + b2.
    """
    B = x.shape[0]
    assert x.shape[1] == 3
    assert w1.shape == (3, 3) and w2.shape == (3, 2)   # (in, out) layout!
    out_dim = w2.shape[1]

    b_pad, tb = _tile_and_pad(B, tile_batch)
    R = b_pad // _LANE

    # Single fused XLA relayout: (B,3) -> zero-padded feature-major (3, R, 128).
    x_fm = jnp.zeros((3, b_pad), jnp.float32).at[:, :B].set(
        x.astype(jnp.float32).T).reshape(3, R, _LANE)

    out_fm = nnmodel_forward_feature_major(
        x_fm, w1, b1, w2, b2, tile_batch=tb)

    # Slice off padded columns and restore (B, 2); under jit this slice +
    # transpose fuses with the consumer (avoid it entirely if the consumer
    # can take (2, B) directly).
    return out_fm.reshape(out_dim, b_pad)[:, :B].T


def init_params(key):
    # Mimic torch.nn.Linear default init: U(-1/sqrt(fan_in), 1/sqrt(fan_in)).
    k1, k2, k3, k4 = jax.random.split(key, 4)
    bound = 1.0 / jnp.sqrt(3.0)
    # Stored as (in, out) = transpose of PyTorch's (out, in); biases 1-D.
    w1 = jax.random.uniform(k1, (3, 3), jnp.float32, -bound, bound)
    b1 = jax.random.uniform(k2, (3,), jnp.float32, -bound, bound)
    w2 = jax.random.uniform(k3, (3, 2), jnp.float32, -bound, bound)
    b2 = jax.random.uniform(k4, (2,), jnp.float32, -bound, bound)
    return w1, b1, w2, b2


def reference_forward(x, w1, b1, w2, b2):
    h = jnp.maximum(x @ w1 + b1, 0.0)
    return h @ w2 + b2


if __name__ == "__main__":
    key = jax.random.PRNGKey(0)
    k_x, k_p = jax.random.split(key)

    w1, b1, w2, b2 = init_params(k_p)
    forward = jax.jit(nnmodel_forward)   # whole forward under one jit

    # Small, deterministic inputs; B=2052 exercises padding and a multi-step
    # ("parallel") grid, B=5 exercises the tiny-batch path.
    ok = True
    for B in (2052, 5):
        x = jax.random.normal(jax.random.fold_in(k_x, B), (B, 3), jnp.float32)
        out = jax.block_until_ready(forward(x, w1, b1, w2, b2))
        ref = reference_forward(x, w1, b1, w2, b2)
        ok &= out.shape == (B, 2)
        ok &= bool(jnp.allclose(out, ref, atol=1e-5, rtol=1e-5))

    assert ok
    print("KERNEL_OK")
</pallas_src>

<mosaic_0001>
module attributes {stable_mosaic.version = 11 : i64} {
  func.func @mlp_kernel(%arg0: i32, %arg1: memref<3x3xf32, #tpu.memory_space<smem>>, %arg2: memref<3xf32, #tpu.memory_space<smem>>, %arg3: memref<3x2xf32, #tpu.memory_space<smem>>, %arg4: memref<2xf32, #tpu.memory_space<smem>>, %arg5: memref<3x8x128xf32, #tpu.memory_space<vmem>>, %arg6: memref<2x8x128xf32, #tpu.memory_space<vmem>>) attributes {dimension_semantics = [#tpu.dimension_semantics<parallel>], iteration_bounds = array<i64: 3>, scalar_prefetch = 0 : i64, scratch_operands = 0 : i64, tpu.core_type = #tpu.core_type<tc>, window_params = [{transform_indices = @transform_0, window_bounds = array<i64: 3, 3>}, {transform_indices = @transform_1, window_bounds = array<i64: 3>}, {transform_indices = @transform_2, window_bounds = array<i64: 3, 2>}, {transform_indices = @transform_3, window_bounds = array<i64: 2>}, {transform_indices = @transform_4, window_bounds = array<i64: 3, 8, 128>}, {transform_indices = @transform_5, window_bounds = array<i64: 2, 8, 128>}]} {
    %c0 = arith.constant 0 : index
    %c0_0 = arith.constant 0 : index
    %c0_1 = arith.constant 0 : index
    %0 = vector.load %arg5[%c0, %c0_0, %c0_1] : memref<3x8x128xf32, #tpu.memory_space<vmem>>, vector<1x8x128xf32>
    %1 = vector.shape_cast %0 : vector<1x8x128xf32> to vector<8x128xf32>
    %c1 = arith.constant 1 : index
    %c0_2 = arith.constant 0 : index
    %c0_3 = arith.constant 0 : index
    %2 = vector.load %arg5[%c1, %c0_2, %c0_3] : memref<3x8x128xf32, #tpu.memory_space<vmem>>, vector<1x8x128xf32>
    %3 = vector.shape_cast %2 : vector<1x8x128xf32> to vector<8x128xf32>
    %c2 = arith.constant 2 : index
    %c0_4 = arith.constant 0 : index
    %c0_5 = arith.constant 0 : index
    %4 = vector.load %arg5[%c2, %c0_4, %c0_5] : memref<3x8x128xf32, #tpu.memory_space<vmem>>, vector<1x8x128xf32>
    %5 = vector.shape_cast %4 : vector<1x8x128xf32> to vector<8x128xf32>
    %c0_6 = arith.constant 0 : index
    %c0_7 = arith.constant 0 : index
    %6 = memref.load %arg1[%c0_6, %c0_7] : memref<3x3xf32, #tpu.memory_space<smem>>
    %7 = vector.broadcast %6 : f32 to vector<8x128xf32>
    %8 = arith.mulf %1, %7 : vector<8x128xf32>
    %c1_8 = arith.constant 1 : index
    %c0_9 = arith.constant 0 : index
    %9 = memref.load %arg1[%c1_8, %c0_9] : memref<3x3xf32, #tpu.memory_space<smem>>
    %10 = vector.broadcast %9 : f32 to vector<8x128xf32>
    %11 = arith.mulf %3, %10 : vector<8x128xf32>
    %12 = arith.addf %8, %11 : vector<8x128xf32>
    %c2_10 = arith.constant 2 : index
    %c0_11 = arith.constant 0 : index
    %13 = memref.load %arg1[%c2_10, %c0_11] : memref<3x3xf32, #tpu.memory_space<smem>>
    %14 = vector.broadcast %13 : f32 to vector<8x128xf32>
    %15 = arith.mulf %5, %14 : vector<8x128xf32>
    %16 = arith.addf %12, %15 : vector<8x128xf32>
    %c0_12 = arith.constant 0 : index
    %17 = memref.load %arg2[%c0_12] : memref<3xf32, #tpu.memory_space<smem>>
    %18 = vector.broadcast %17 : f32 to vector<8x128xf32>
    %19 = arith.addf %16, %18 : vector<8x128xf32>
    %cst = arith.constant 0.000000e+00 : f32
    %20 = vector.broadcast %cst : f32 to vector<8x128xf32>
    %21 = arith.maximumf %19, %20 : vector<8x128xf32>
    %c0_13 = arith.constant 0 : index
    %c1_14 = arith.constant 1 : index
    %22 = memref.load %arg1[%c0_13, %c1_14] : memref<3x3xf32, #tpu.memory_space<smem>>
    %23 = vector.broadcast %22 : f32 to vector<8x128xf32>
    %24 = arith.mulf %1, %23 : vector<8x128xf32>
    %c1_15 = arith.constant 1 : index
    %c1_16 = arith.constant 1 : index
    %25 = memref.load %arg1[%c1_15, %c1_16] : memref<3x3xf32, #tpu.memory_space<smem>>
    %26 = vector.broadcast %25 : f32 to vector<8x128xf32>
    %27 = arith.mulf %3, %26 : vector<8x128xf32>
    %28 = arith.addf %24, %27 : vector<8x128xf32>
    %c2_17 = arith.constant 2 : index
    %c1_18 = arith.constant 1 : index
    %29 = memref.load %arg1[%c2_17, %c1_18] : memref<3x3xf32, #tpu.memory_space<smem>>
    %30 = vector.broadcast %29 : f32 to vector<8x128xf32>
    %31 = arith.mulf %5, %30 : vector<8x128xf32>
    %32 = arith.addf %28, %31 : vector<8x128xf32>
    %c1_19 = arith.constant 1 : index
    %33 = memref.load %arg2[%c1_19] : memref<3xf32, #tpu.memory_space<smem>>
    %34 = vector.broadcast %33 : f32 to vector<8x128xf32>
    %35 = arith.addf %32, %34 : vector<8x128xf32>
    %cst_20 = arith.constant 0.000000e+00 : f32
    %36 = vector.broadcast %cst_20 : f32 to vector<8x128xf32>
    %37 = arith.maximumf %35, %36 : vector<8x128xf32>
    %c0_21 = arith.constant 0 : index
    %c2_22 = arith.constant 2 : index
    %38 = memref.load %arg1[%c0_21, %c2_22] : memref<3x3xf32, #tpu.memory_space<smem>>
    %39 = vector.broadcast %38 : f32 to vector<8x128xf32>
    %40 = arith.mulf %1, %39 : vector<8x128xf32>
    %c1_23 = arith.constant 1 : index
    %c2_24 = arith.constant 2 : index
    %41 = memref.load %arg1[%c1_23, %c2_24] : memref<3x3xf32, #tpu.memory_space<smem>>
    %42 = vector.broadcast %41 : f32 to vector<8x128xf32>
    %43 = arith.mulf %3, %42 : vector<8x128xf32>
    %44 = arith.addf %40, %43 : vector<8x128xf32>
    %c2_25 = arith.constant 2 : index
    %c2_26 = arith.constant 2 : index
    %45 = memref.load %arg1[%c2_25, %c2_26] : memref<3x3xf32, #tpu.memory_space<smem>>
    %46 = vector.broadcast %45 : f32 to vector<8x128xf32>
    %47 = arith.mulf %5, %46 : vector<8x128xf32>
    %48 = arith.addf %44, %47 : vector<8x128xf32>
    %c2_27 = arith.constant 2 : index
    %49 = memref.load %arg2[%c2_27] : memref<3xf32, #tpu.memory_space<smem>>
    %50 = vector.broadcast %49 : f32 to vector<8x128xf32>
    %51 = arith.addf %48, %50 : vector<8x128xf32>
    %cst_28 = arith.constant 0.000000e+00 : f32
    %52 = vector.broadcast %cst_28 : f32 to vector<8x128xf32>
    %53 = arith.maximumf %51, %52 : vector<8x128xf32>
    %c0_29 = arith.constant 0 : index
    %c0_30 = arith.constant 0 : index
    %54 = memref.load %arg3[%c0_29, %c0_30] : memref<3x2xf32, #tpu.memory_space<smem>>
    %55 = vector.broadcast %54 : f32 to vector<8x128xf32>
    %56 = arith.mulf %21, %55 : vector<8x128xf32>
    %c1_31 = arith.constant 1 : index
    %c0_32 = arith.constant 0 : index
    %57 = memref.load %arg3[%c1_31, %c0_32] : memref<3x2xf32, #tpu.memory_space<smem>>
    %58 = vector.broadcast %57 : f32 to vector<8x128xf32>
    %59 = arith.mulf %37, %58 : vector<8x128xf32>
    %60 = arith.addf %56, %59 : vector<8x128xf32>
    %c2_33 = arith.constant 2 : index
    %c0_34 = arith.constant 0 : index
    %61 = memref.load %arg3[%c2_33, %c0_34] : memref<3x2xf32, #tpu.memory_space<smem>>
    %62 = vector.broadcast %61 : f32 to vector<8x128xf32>
    %63 = arith.mulf %53, %62 : vector<8x128xf32>
    %64 = arith.addf %60, %63 : vector<8x128xf32>
    %c0_35 = arith.constant 0 : index
    %65 = memref.load %arg4[%c0_35] : memref<2xf32, #tpu.memory_space<smem>>
    %66 = vector.broadcast %65 : f32 to vector<8x128xf32>
    %67 = arith.addf %64, %66 : vector<8x128xf32>
    %c0_36 = arith.constant 0 : index
    %c0_37 = arith.constant 0 : index
    %c0_38 = arith.constant 0 : index
    %68 = vector.load %arg6[%c0_36, %c0_37, %c0_38] : memref<2x8x128xf32, #tpu.memory_space<vmem>>, vector<1x8x128xf32>
    %69 = vector.shape_cast %68 : vector<1x8x128xf32> to vector<8x128xf32>
    %70 = vector.shape_cast %67 : vector<8x128xf32> to vector<1x8x128xf32>
    tpu.vector_store %arg6[%c0_36, %c0_37, %c0_38], %70 {strides = array<i32>} : memref<2x8x128xf32, #tpu.memory_space<vmem>>, vector<1x8x128xf32>,
    %c0_39 = arith.constant 0 : index
    %c1_40 = arith.constant 1 : index
    %71 = memref.load %arg3[%c0_39, %c1_40] : memref<3x2xf32, #tpu.memory_space<smem>>
    %72 = vector.broadcast %71 : f32 to vector<8x128xf32>
    %73 = arith.mulf %21, %72 : vector<8x128xf32>
    %c1_41 = arith.constant 1 : index
    %c1_42 = arith.constant 1 : index
    %74 = memref.load %arg3[%c1_41, %c1_42] : memref<3x2xf32, #tpu.memory_space<smem>>
    %75 = vector.broadcast %74 : f32 to vector<8x128xf32>
    %76 = arith.mulf %37, %75 : vector<8x128xf32>
    %77 = arith.addf %73, %76 : vector<8x128xf32>
    %c2_43 = arith.constant 2 : index
    %c1_44 = arith.constant 1 : index
    %78 = memref.load %arg3[%c2_43, %c1_44] : memref<3x2xf32, #tpu.memory_space<smem>>
    %79 = vector.broadcast %78 : f32 to vector<8x128xf32>
    %80 = arith.mulf %53, %79 : vector<8x128xf32>
    %81 = arith.addf %77, %80 : vector<8x128xf32>
    %c1_45 = arith.constant 1 : index
    %82 = memref.load %arg4[%c1_45] : memref<2xf32, #tpu.memory_space<smem>>
    %83 = vector.broadcast %82 : f32 to vector<8x128xf32>
    %84 = arith.addf %81, %83 : vector<8x128xf32>
    %c1_46 = arith.constant 1 : index
    %c0_47 = arith.constant 0 : index
    %c0_48 = arith.constant 0 : index
    %85 = vector.load %arg6[%c1_46, %c0_47, %c0_48] : memref<2x8x128xf32, #tpu.memory_space<vmem>>, vector<1x8x128xf32>
    %86 = vector.shape_cast %85 : vector<1x8x128xf32> to vector<8x128xf32>
    %87 = vector.shape_cast %84 : vector<8x128xf32> to vector<1x8x128xf32>
    tpu.vector_store %arg6[%c1_46, %c0_47, %c0_48], %87 {strides = array<i32>} : memref<2x8x128xf32, #tpu.memory_space<vmem>>, vector<1x8x128xf32>,
    return
  }
  func.func @transform_0(%arg0: i32) -> (i32, i32) {
    %c0_i32 = arith.constant 0 : i32
    %c0_i32_0 = arith.constant 0 : i32
    %c0_i32_1 = arith.constant 0 : i32
    return %c0_i32, %c0_i32_0 : i32, i32
  }
  func.func @transform_1(%arg0: i32) -> i32 {
    %c0_i32 = arith.constant 0 : i32
    %c0_i32_0 = arith.constant 0 : i32
    return %c0_i32 : i32
  }
  func.func @transform_2(%arg0: i32) -> (i32, i32) {
    %c0_i32 = arith.constant 0 : i32
    %c0_i32_0 = arith.constant 0 : i32
    %c0_i32_1 = arith.constant 0 : i32
    return %c0_i32, %c0_i32_0 : i32, i32
  }
  func.func @transform_3(%arg0: i32) -> i32 {
    %c0_i32 = arith.constant 0 : i32
    %c0_i32_0 = arith.constant 0 : i32
    return %c0_i32 : i32
  }
  func.func @transform_4(%arg0: i32) -> (i32, i32, i32) {
    %c0_i32 = arith.constant 0 : i32
    %c0_i32_0 = arith.constant 0 : i32
    %c0_i32_1 = arith.constant 0 : i32
    return %c0_i32, %arg0, %c0_i32_0 : i32, i32, i32
  }
  func.func @transform_5(%arg0: i32) -> (i32, i32, i32) {
    %c0_i32 = arith.constant 0 : i32
    %c0_i32_0 = arith.constant 0 : i32
    %c0_i32_1 = arith.constant 0 : i32
    return %c0_i32, %arg0, %c0_i32_0 : i32, i32, i32
  }
}

</mosaic_0001>

<llo_original>
// kernel: nnmodel_forward.1
$region0: #{nnmodel_forward.1}
  #allocation0 [shape = 'u32[]', space=smem, size = 0x4, offset = 0x4, fixed_abs, tag = 'smem constant byte address 0x4 - core index']
  #allocation1 [shape = 'u32[72,128]{1,0:T(1,128)}', space=vmem, size = 0x9000, scoped, tag = 'internal scratch']
  %s0 = inlined_call_operand.vmem [shape: f32[3,3], index: 0, kind: input, shape index: {}]
  %s1 = inlined_call_operand.vmem [shape: f32[3], index: 1, kind: input, shape index: {}]
  %s2 = inlined_call_operand.vmem [shape: f32[3,2], index: 2, kind: input, shape index: {}]
  %s3 = inlined_call_operand.vmem [shape: f32[2], index: 3, kind: input, shape index: {}]
  %s4 = inlined_call_operand.vmem [shape: f32[3,24,128], index: 4, kind: input, shape index: {}]
  %s5 = inlined_call_operand.vmem [shape: f32[2,24,128], index: 5, kind: output, shape index: {}]
  %s6 = sld [smem:[#allocation0]]
  $region141: #{nnmodel_forward.1} parent=0
    _
  %s8 = ssub.s32 1, %s6
  %s9 = scalar_select 0, %s8, %s6
  $region1: #{nnmodel_forward.1} parent=0
    #allocation2 [shape = 'u8[2048]{0}', space=smem, size = 0x800, scoped, tag = 'input window, operand 0, single buffered']
    #allocation3 [shape = 's32[2]{0}', space=sflag, size = 0x8, scoped, tag = 'scoped memory for nnmodel_forward.1']
    #allocation4 [shape = 'u8[512]{0}', space=smem, size = 0x200, scoped, tag = 'input window, operand 1, single buffered']
    #allocation5 [shape = 's32[1]{0}', space=sflag, size = 0x4, scoped, tag = 'scoped memory for nnmodel_forward.1']
    #allocation6 [shape = 'u8[2048]{0}', space=smem, size = 0x800, scoped, tag = 'input window, operand 2, single buffered']
    #allocation7 [shape = 'u8[512]{0}', space=smem, size = 0x200, scoped, tag = 'input window, operand 3, single buffered']
    #allocation8 [shape = 's32[1]{0}', space=sflag, size = 0x4, scoped, tag = 'scoped memory for nnmodel_forward.1']
    #allocation9 [shape = 'u8[24576]{0}', space=vmem, size = 0x6000, scoped, tag = 'input window, operand 4']
    #allocation10 [shape = 'u8[16384]{0}', space=vmem, size = 0x4000, scoped, tag = 'output window, operand 0']
    %10 = vsyncpa [#allocation3], 0
    %11 = vsyncpa [#allocation5], 0
    %12 = vsyncpa [#allocation8], 0
    loop: start=0, step=1, limit=5
    $region2: #{nnmodel_forward.1} parent=1 // loop_pre_header
      _
    $region3: #{nnmodel_forward.1} parent=1 // loop_header
      %s14 = sphi 0, %s18
      %p15 = scmp.ge.s32.totalorder %s14, 5
      %s22 = sphi 0, %s22
      %s24 = sphi 0, %s22
      %s25 = sphi 0, %s24
      %s39 = sphi 0, %s25
      %s43 = sphi 0, %s43
      %s45 = sphi 0, %s43
      %s46 = sphi 0, %s45
      %s60 = sphi 0, %s46
      %s64 = sphi 0, %s64
      %s66 = sphi 0, %s64
      %s67 = sphi 0, %s66
      %s81 = sphi 0, %s67
      %s85 = sphi 0, %s85
      %s87 = sphi 0, %s85
      %s88 = sphi 0, %s87
      %s102 = sphi 0, %s88
      %s108 = sphi 0, %s110
      %s111 = sphi 0, %s108
      %s112 = sphi 0, %s111
      %s128 = sphi 0, %s112
      %s134 = sphi 0, %s136
      %s137 = sphi 0, %s134
      %s138 = sphi 0, %s137
      %s154 = sphi 0, %s138
    $region4: #{nnmodel_forward.1} parent=1 // loop_header_branch
      %17 = sbr.rel (%p15) target = $region8
    $region5: #{nnmodel_forward.1} parent=1 // loop_body
      %s19 = ssub.s32 %s14, 1
      %s20 = ssub.s32 %s14, 2
      %s21 = sadd.s32 %s14, 1
      %s23 = sadd.s32 %s22, 1
      %p26 = scmp.eq.s32.totalorder %s14, 2
      %p27 = scmp.ne.s32.totalorder %s22, %s24
      %p28 = scmp.eq.s32.totalorder %s14, 0
      %p29 = por %p27, %p28
      %p30 = scmp.ne.s32.totalorder %s22, %s24
      %p31 = scmp.eq.s32.totalorder %s19, 2
      %p32 = por %p30, %p31
      %p33 = scmp.ne.s32.totalorder %s24, %s25
      %p34 = scmp.eq.s32.totalorder %s19, 0
      %p35 = por %p33, %p34
      %p36 = scmp.ne.s32.totalorder %s24, %s25
      %p37 = scmp.eq.s32.totalorder %s20, 2
      %p38 = por %p36, %p37
      %p40 = scmp.ne.s32.totalorder %s25, %s39
      %p41 = scmp.eq.s32.totalorder %s20, 0
      %p42 = por %p40, %p41
      %s44 = sadd.s32 %s43, 1
      %p47 = scmp.eq.s32.totalorder %s14, 2
      %p48 = scmp.ne.s32.totalorder %s43, %s45
      %p49 = scmp.eq.s32.totalorder %s14, 0
      %p50 = por %p48, %p49
      %p51 = scmp.ne.s32.totalorder %s43, %s45
      %p52 = scmp.eq.s32.totalorder %s19, 2
      %p53 = por %p51, %p52
      %p54 = scmp.ne.s32.totalorder %s45, %s46
      %p55 = scmp.eq.s32.totalorder %s19, 0
      %p56 = por %p54, %p55
      %p57 = scmp.ne.s32.totalorder %s45, %s46
      %p58 = scmp.eq.s32.totalorder %s20, 2
      %p59 = por %p57, %p58
      %p61 = scmp.ne.s32.totalorder %s46, %s60
      %p62 = scmp.eq.s32.totalorder %s20, 0
      %p63 = por %p61, %p62
      %s65 = sadd.s32 %s64, 1
      %p68 = scmp.eq.s32.totalorder %s14, 2
      %p69 = scmp.ne.s32.totalorder %s64, %s66
      %p70 = scmp.eq.s32.totalorder %s14, 0
      %p71 = por %p69, %p70
      %p72 = scmp.ne.s32.totalorder %s64, %s66
      %p73 = scmp.eq.s32.totalorder %s19, 2
      %p74 = por %p72, %p73
      %p75 = scmp.ne.s32.totalorder %s66, %s67
      %p76 = scmp.eq.s32.totalorder %s19, 0
      %p77 = por %p75, %p76
      %p78 = scmp.ne.s32.totalorder %s66, %s67
      %p79 = scmp.eq.s32.totalorder %s20, 2
      %p80 = por %p78, %p79
      %p82 = scmp.ne.s32.totalorder %s67, %s81
      %p83 = scmp.eq.s32.totalorder %s20, 0
      %p84 = por %p82, %p83
      %s86 = sadd.s32 %s85, 1
      %p89 = scmp.eq.s32.totalorder %s14, 2
      %p90 = scmp.ne.s32.totalorder %s85, %s87
      %p91 = scmp.eq.s32.totalorder %s14, 0
      %p92 = por %p90, %p91
      %p93 = scmp.ne.s32.totalorder %s85, %s87
      %p94 = scmp.eq.s32.totalorder %s19, 2
      %p95 = por %p93, %p94
      %p96 = scmp.ne.s32.totalorder %s87, %s88
      %p97 = scmp.eq.s32.totalorder %s19, 0
      %p98 = por %p96, %p97
      %p99 = scmp.ne.s32.totalorder %s87, %s88
      %p100 = scmp.eq.s32.totalorder %s20, 2
      %p101 = por %p99, %p100
      %p103 = scmp.ne.s32.totalorder %s88, %s102
      %p104 = scmp.eq.s32.totalorder %s20, 0
      %p105 = por %p103, %p104
      %s106 = ssub.s32 %s14, %s21
      %p107 = scmp.eq.s32.totalorder %s106, 0
      %s109 = sadd.s32 %s108, 1
      %s110 = scalar_select %p107, %s108, %s109
      %p113 = pneg %p107
      %p114 = scmp.eq.s32.totalorder %s14, 2
      %p115 = por %p113, %p114
      %p116 = scmp.ne.s32.totalorder %s108, %s111
      %p117 = scmp.eq.s32.totalorder %s14, 0
      %p118 = por %p116, %p117
      %p119 = scmp.ne.s32.totalorder %s108, %s111
      %p120 = scmp.eq.s32.totalorder %s19, 2
      %p121 = por %p119, %p120
      %p122 = scmp.ne.s32.totalorder %s111, %s112
      %p123 = scmp.eq.s32.totalorder %s19, 0
      %p124 = por %p122, %p123
      %p125 = scmp.ne.s32.totalorder %s111, %s112
      %p126 = scmp.eq.s32.totalorder %s20, 2
      %p127 = por %p125, %p126
      %p129 = scmp.ne.s32.totalorder %s112, %s128
      %p130 = scmp.eq.s32.totalorder %s20, 0
      %p131 = por %p129, %p130
      %s132 = ssub.s32 %s14, %s21
      %p133 = scmp.eq.s32.totalorder %s132, 0
      %s135 = sadd.s32 %s134, 1
      %s136 = scalar_select %p133, %s134, %s135
      %p139 = pneg %p133
      %p140 = scmp.eq.s32.totalorder %s14, 2
      %p141 = por %p139, %p140
      %p142 = scmp.ne.s32.totalorder %s134, %s137
      %p143 = scmp.eq.s32.totalorder %s14, 0
      %p144 = por %p142, %p143
      %p145 = scmp.ne.s32.totalorder %s134, %s137
      %p146 = scmp.eq.s32.totalorder %s19, 2
      %p147 = por %p145, %p146
      %p148 = scmp.ne.s32.totalorder %s137, %s138
      %p149 = scmp.eq.s32.totalorder %s19, 0
      %p150 = por %p148, %p149
      %p151 = scmp.ne.s32.totalorder %s137, %s138
      %p152 = scmp.eq.s32.totalorder %s20, 2
      %p153 = por %p151, %p152
      %p155 = scmp.ne.s32.totalorder %s138, %s154
      %p156 = scmp.eq.s32.totalorder %s20, 0
      %p157 = por %p155, %p156
      %p158 = scmp.le.s32.totalorder 1, %s14
      %p159 = scmp.lt.s32.totalorder %s14, 4
      %p160 = pnand %p158, %p159
      %p161 = pneg %p160
      // Predicated region
      $region9: #{nnmodel_forward.1} parent=5 // pred_check
        _
      $region10: #{nnmodel_forward.1} parent=5 // pred_check_branch
        %163 = sbr.rel (%p160) target = $region12
      $region11: #{nnmodel_forward.1} parent=5 // pred_region
        %s164 = ssub.s32 %s14, 1
        // Predicated region
        $region13: #{nnmodel_forward.1} parent=11 // pred_check
          %p165 = pneg %p35
        $region14: #{nnmodel_forward.1} parent=11 // pred_check_branch
          %167 = sbr.rel (%p165) target = $region16
        $region15: #{nnmodel_forward.1} parent=11 // pred_region
          %169 = vsyncadd [#allocation3], 0
          %s171 = sshll.u32 %s0, 4
          %s172 = int_to_ptr.vmem [resolvable:$true] %s171
          %174 = dma.vmem_to_smem %s172, 64, [#allocation2], [#allocation3]
        $region16: #{nnmodel_forward.1} parent=11 // pred_fallthru
          _
        // Predicated region
        $region17: #{nnmodel_forward.1} parent=11 // pred_check
          %p175 = pneg %p56
        $region18: #{nnmodel_forward.1} parent=11 // pred_check_branch
          %177 = sbr.rel (%p175) target = $region20
        $region19: #{nnmodel_forward.1} parent=11 // pred_region
          %179 = vsyncadd [#allocation5], 0
          %s181 = sshll.u32 %s1, 4
          %s182 = int_to_ptr.vmem [resolvable:$true] %s181
          %184 = dma.vmem_to_smem %s182, 16, [#allocation4], [#allocation5]
        $region20: #{nnmodel_forward.1} parent=11 // pred_fallthru
          _
        // Predicated region
        $region21: #{nnmodel_forward.1} parent=11 // pred_check
          %p185 = pneg %p77
        $region22: #{nnmodel_forward.1} parent=11 // pred_check_branch
          %187 = sbr.rel (%p185) target = $region24
        $region23: #{nnmodel_forward.1} parent=11 // pred_region
          %189 = vsyncadd [#allocation5], 0
          %s191 = sshll.u32 %s2, 4
          %s192 = int_to_ptr.vmem [resolvable:$true] %s191
          %194 = dma.vmem_to_smem %s192, 64, [#allocation6], [#allocation5]
        $region24: #{nnmodel_forward.1} parent=11 // pred_fallthru
          _
        // Predicated region
        $region25: #{nnmodel_forward.1} parent=11 // pred_check
          %p195 = pneg %p98
        $region26: #{nnmodel_forward.1} parent=11 // pred_check_branch
          %197 = sbr.rel (%p195) target = $region28
        $region27: #{nnmodel_forward.1} parent=11 // pred_region
          %199 = vsyncadd [#allocation8], 0
          %s201 = sshll.u32 %s3, 4
          %s202 = int_to_ptr.vmem [resolvable:$true] %s201
          %204 = dma.vmem_to_smem %s202, 16, [#allocation7], [#allocation8]
        $region28: #{nnmodel_forward.1} parent=11 // pred_fallthru
          _
      $region12: #{nnmodel_forward.1} parent=5 // pred_fallthru
        _
      %p205 = scmp.lt.s32.totalorder %s14, 3
      // Predicated region
      $region29: #{nnmodel_forward.1} parent=5 // pred_check
        %p206 = pneg %p205
      $region30: #{nnmodel_forward.1} parent=5 // pred_check_branch
        %208 = sbr.rel (%p206) target = $region32
      $region31: #{nnmodel_forward.1} parent=5 // pred_region
        // Predicated region
        $region33: #{nnmodel_forward.1} parent=31 // pred_check
          %p209 = pneg %p118
        $region34: #{nnmodel_forward.1} parent=31 // pred_check_branch
          %211 = sbr.rel (%p209) target = $region36
        $region35: #{nnmodel_forward.1} parent=31 // pred_region
          %s212 = sand.u32 %s108, 1
          %s213 = sand.u32 %s108, 1
          %s214 = smul.addr %s213, 24
          %s215 = scalar_lea.vmem [#allocation9], %s214
          %s216 = smul.addr %s14, 8
          %s217 = scalar_lea.vmem %s4, %s216
          // Predicated region
          $region37: #{nnmodel_forward.1} parent=35 // pred_check
            _
          $region38: #{nnmodel_forward.1} parent=35 // pred_check_branch
            %219 = sbr.rel (0) target = $region40
          $region39: #{nnmodel_forward.1} parent=35 // pred_region
            // Predicated region
            $region41: #{nnmodel_forward.1} parent=39 // pred_check
              _
            $region42: #{nnmodel_forward.1} parent=39 // pred_check_branch
              %221 = sbr.rel (0) target = $region44
            $region43: #{nnmodel_forward.1} parent=39 // pred_region
              // Predicated region
              $region56: #{nnmodel_forward.1} parent=43 // pred_check
                _
              $region57: #{nnmodel_forward.1} parent=43 // pred_check_branch
                %241 = sbr.rel (0) target = $region59
              $region58: #{nnmodel_forward.1} parent=43 // pred_region
                loop: start=0, step=1, limit=1
                $region60: #{nnmodel_forward.1} parent=58 // loop_pre_header
                  _
                $region61: #{nnmodel_forward.1} parent=58 // loop_header
                  %s243 = sphi 0, %s247
                  %p244 = scmp.ge.s32.totalorder %s243, 1
                  %s248 = sphi %s217, %s217
                  %s249 = sphi %s215, %s215
                $region62: #{nnmodel_forward.1} parent=58 // loop_header_branch
                  %246 = sbr.rel (%p244) target = $region66
                $region63: #{nnmodel_forward.1} parent=58 // loop_body
                  %v250 = vld [vmem:[%s248] sm:$0xff]
                  %251 = vst [vmem:[%s249] sm:$0xff] %v250
                  %v252 = vld [vmem:[%s248 + $0x18] sm:$0xff]
                  %253 = vst [vmem:[%s249 + $0x8] sm:$0xff] %v252
                  %v254 = vld [vmem:[%s248 + $0x30] sm:$0xff]
                  %255 = vst [vmem:[%s249 + $0x10] sm:$0xff] %v254
                $region64: #{nnmodel_forward.1} parent=58 // loop_footer
                  %s247 = sadd.s32 1, %s243
                $region65: #{nnmodel_forward.1} parent=58 // loop_footer_branch
                  %242 = sbr.rel target = $region61
                $region66: #{nnmodel_forward.1} parent=58 // loop_exit
                  _
              $region59: #{nnmodel_forward.1} parent=43 // pred_fallthru
                _
              // Predicated region
              $region67: #{nnmodel_forward.1} parent=43 // pred_check
                _
              $region68: #{nnmodel_forward.1} parent=43 // pred_check_branch
                %257 = sbr.rel target = $region70
              $region69: #{nnmodel_forward.1} parent=43 // pred_region
                _
              $region70: #{nnmodel_forward.1} parent=43 // pred_fallthru
                _
            $region44: #{nnmodel_forward.1} parent=39 // pred_fallthru
              _
            // Predicated region
            $region45: #{nnmodel_forward.1} parent=39 // pred_check
              _
            $region46: #{nnmodel_forward.1} parent=39 // pred_check_branch
              %223 = sbr.rel target = $region48
            $region47: #{nnmodel_forward.1} parent=39 // pred_region
              %s225 = ssub.s32 256, 1
              loop: start=0, step=1, limit=1
              $region49: #{nnmodel_forward.1} parent=47 // loop_pre_header
                _
              $region50: #{nnmodel_forward.1} parent=47 // loop_header
                %s227 = sphi 0, %s231
                %p228 = scmp.ge.s32.totalorder %s227, 1
                %s232 = sphi %s217, %s217
                %s233 = sphi %s215, %s215
              $region51: #{nnmodel_forward.1} parent=47 // loop_header_branch
                %230 = sbr.rel (%p228) target = $region55
              $region52: #{nnmodel_forward.1} parent=47 // loop_body
                %v234 = vld [vmem:[%s232] sm:%s225]
                %235 = vst [vmem:[%s233] sm:%s225] %v234
                %v236 = vld [vmem:[%s232 + $0x18] sm:%s225]
                %237 = vst [vmem:[%s233 + $0x8] sm:%s225] %v236
                %v238 = vld [vmem:[%s232 + $0x30] sm:%s225]
                %239 = vst [vmem:[%s233 + $0x10] sm:%s225] %v238
              $region53: #{nnmodel_forward.1} parent=47 // loop_footer
                %s231 = sadd.s32 1, %s227
              $region54: #{nnmodel_forward.1} parent=47 // loop_footer_branch
                %226 = sbr.rel target = $region50
              $region55: #{nnmodel_forward.1} parent=47 // loop_exit
                _
            $region48: #{nnmodel_forward.1} parent=39 // pred_fallthru
              _
          $region40: #{nnmodel_forward.1} parent=35 // pred_fallthru
            _
          %258 = vnop
        $region36: #{nnmodel_forward.1} parent=31 // pred_fallthru
          _
      $region32: #{nnmodel_forward.1} parent=5 // pred_fallthru
        _
      %p259 = scmp.le.s32.totalorder 1, %s14
      %p260 = scmp.lt.s32.totalorder %s14, 4
      %p261 = pnand %p259, %p260
      %p262 = pneg %p261
      // Predicated region
      $region71: #{nnmodel_forward.1} parent=5 // pred_check
        _
      $region72: #{nnmodel_forward.1} parent=5 // pred_check_branch
        %264 = sbr.rel (%p261) target = $region74
      $region73: #{nnmodel_forward.1} parent=5 // pred_region
        %s265 = ssub.s32 %s14, 1
        // Predicated region
        $region75: #{nnmodel_forward.1} parent=73 // pred_check
          %p266 = pneg %p35
        $region76: #{nnmodel_forward.1} parent=73 // pred_check_branch
          %268 = sbr.rel (%p266) target = $region78
        $region77: #{nnmodel_forward.1} parent=73 // pred_region
          %270 = dma.done [#allocation3], 64
        $region78: #{nnmodel_forward.1} parent=73 // pred_fallthru
          _
        // Predicated region
        $region79: #{nnmodel_forward.1} parent=73 // pred_check
          %p271 = pneg %p56
        $region80: #{nnmodel_forward.1} parent=73 // pred_check_branch
          %273 = sbr.rel (%p271) target = $region82
        $region81: #{nnmodel_forward.1} parent=73 // pred_region
          %275 = dma.done [#allocation5], 16
        $region82: #{nnmodel_forward.1} parent=73 // pred_fallthru
          _
        // Predicated region
        $region83: #{nnmodel_forward.1} parent=73 // pred_check
          %p276 = pneg %p77
        $region84: #{nnmodel_forward.1} parent=73 // pred_check_branch
          %278 = sbr.rel (%p276) target = $region86
        $region85: #{nnmodel_forward.1} parent=73 // pred_region
          %280 = dma.done [#allocation5], 64
        $region86: #{nnmodel_forward.1} parent=73 // pred_fallthru
          _
        // Predicated region
        $region87: #{nnmodel_forward.1} parent=73 // pred_check
          %p281 = pneg %p98
        $region88: #{nnmodel_forward.1} parent=73 // pred_check_branch
          %283 = sbr.rel (%p281) target = $region90
        $region89: #{nnmodel_forward.1} parent=73 // pred_region
          %285 = dma.done [#allocation8], 16
        $region90: #{nnmodel_forward.1} parent=73 // pred_fallthru
          _
        %s286 = sand.u32 %s111, 1
        %s287 = sand.u32 %s111, 1
        %s288 = smul.addr %s287, 24
        %s289 = scalar_lea.vmem [#allocation9], %s288
        // Predicated region
        $region91: #{nnmodel_forward.1} parent=73 // pred_check
          %p290 = pneg %p124
        $region92: #{nnmodel_forward.1} parent=73 // pred_check_branch
          %292 = sbr.rel (%p290) target = $region94
        $region93: #{nnmodel_forward.1} parent=73 // pred_region
          _
        $region94: #{nnmodel_forward.1} parent=73 // pred_fallthru
          _
        %293 = sfence
        %p294 = pneg %p35
        %p295 = pneg %p32
        %p296 = pneg %p56
        %p297 = pneg %p53
        %p298 = pneg %p77
        %p299 = pneg %p74
        %p300 = pneg %p98
        %p301 = pneg %p95
        %s302 = sand.u32 %s111, 1
        %s303 = sand.u32 %s111, 1
        %s304 = smul.addr %s303, 24
        %s305 = scalar_lea.vmem [#allocation9], %s304
        %p306 = pneg %p124
        %p307 = pneg %p121
        %p308 = pneg %p150
        %p309 = pneg %p147
        %s310 = sand.u32 %s137, 1
        %s311 = sand.u32 %s137, 1
        %s312 = smul.addr %s311, 16
        %s313 = scalar_lea.vmem [#allocation10], %s312
        %v314 = vld [vmem:[%s289] sm:$0xff]
        %s315 = scalar_lea.vmem %s289, 8 [#allocation9]
        %v316 = vld [vmem:[%s315] sm:$0xff]
        %s317 = scalar_lea.vmem %s289, 16 [#allocation9]
        %v318 = vld [vmem:[%s317] sm:$0xff]
        %s319 = sld [smem:[#allocation2]]
        %v320 = vstv %s319
        %v321 = vmul.f32 %v314, %v320
        %s322 = sld [smem:[#allocation2 + $0x80]]
        %v323 = vstv %s322
        %v324 = vmul.f32 %v316, %v323
        %v325 = vadd.f32 %v321, %v324
        %s326 = sld [smem:[#allocation2 + $0x100]]
        %v327 = vstv %s326
        %v328 = vmul.f32 %v318, %v327
        %v329 = vadd.f32 %v325, %v328
        %s330 = sld [smem:[#allocation4]]
        %v331 = vstv %s330
        %v332 = vadd.f32 %v329, %v331
        %v333 = vmax.f32 %v332, 0.0
        %s334 = sld [smem:[#allocation2 + $0x1]]
        %v335 = vstv %s334
        %v336 = vmul.f32 %v314, %v335
        %s337 = sld [smem:[#allocation2 + $0x81]]
        %v338 = vstv %s337
        %v339 = vmul.f32 %v316, %v338
        %v340 = vadd.f32 %v336, %v339
        %s341 = sld [smem:[#allocation2 + $0x101]]
        %v342 = vstv %s341
        %v343 = vmul.f32 %v318, %v342
        %v344 = vadd.f32 %v340, %v343
        %s345 = sld [smem:[#allocation4 + $0x1]]
        %v346 = vstv %s345
        %v347 = vadd.f32 %v344, %v346
        %v348 = vmax.f32 %v347, 0.0
        %s349 = sld [smem:[#allocation2 + $0x2]]
        %v350 = vstv %s349
        %v351 = vmul.f32 %v314, %v350
        %s352 = sld [smem:[#allocation2 + $0x82]]
        %v353 = vstv %s352
        %v354 = vmul.f32 %v316, %v353
        %v355 = vadd.f32 %v351, %v354
        %s356 = sld [smem:[#allocation2 + $0x102]]
        %v357 = vstv %s356
        %v358 = vmul.f32 %v318, %v357
        %v359 = vadd.f32 %v355, %v358
        %s360 = sld [smem:[#allocation4 + $0x2]]
        %v361 = vstv %s360
        %v362 = vadd.f32 %v359, %v361
        %v363 = vmax.f32 %v362, 0.0
        %s364 = sld [smem:[#allocation6]]
        %v365 = vstv %s364
        %v366 = vmul.f32 %v333, %v365
        %s367 = sld [smem:[#allocation6 + $0x80]]
        %v368 = vstv %s367
        %v369 = vmul.f32 %v348, %v368
        %v370 = vadd.f32 %v366, %v369
        %s371 = sld [smem:[#allocation6 + $0x100]]
        %v372 = vstv %s371
        %v373 = vmul.f32 %v363, %v372
        %v374 = vadd.f32 %v370, %v373
        %s375 = sld [smem:[#allocation7]]
        %v376 = vstv %s375
        %v377 = vadd.f32 %v374, %v376
        %378 = vst [vmem:[%s313] sm:$0xff] %v377
        %s379 = sld [smem:[#allocation6 + $0x1]]
        %v380 = vstv %s379
        %v381 = vmul.f32 %v333, %v380
        %s382 = sld [smem:[#allocation6 + $0x81]]
        %v383 = vstv %s382
        %v384 = vmul.f32 %v348, %v383
        %v385 = vadd.f32 %v381, %v384
        %s386 = sld [smem:[#allocation6 + $0x101]]
        %v387 = vstv %s386
        %v388 = vmul.f32 %v363, %v387
        %v389 = vadd.f32 %v385, %v388
        %s390 = sld [smem:[#allocation7 + $0x1]]
        %v391 = vstv %s390
        %v392 = vadd.f32 %v389, %v391
        %s393 = scalar_lea.vmem %s313, 8 [#allocation10]
        %394 = vst [vmem:[%s393] sm:$0xff] %v392
        %s395 = sand.u32 %s137, 1
        %s396 = sand.u32 %s137, 1
        %s397 = smul.addr %s396, 16
        %s398 = scalar_lea.vmem [#allocation10], %s397
        // Predicated region
        $region95: #{nnmodel_forward.1} parent=73 // pred_check
          %p399 = pneg %p147
        $region96: #{nnmodel_forward.1} parent=73 // pred_check_branch
          %401 = sbr.rel (%p399) target = $region98
        $region97: #{nnmodel_forward.1} parent=73 // pred_region
          %s402 = smul.addr %s19, 8
          %s403 = scalar_lea.vmem %s5, %s402
          // Predicated region
          $region99: #{nnmodel_forward.1} parent=97 // pred_check
            _
          $region100: #{nnmodel_forward.1} parent=97 // pred_check_branch
            %405 = sbr.rel (0) target = $region102
          $region101: #{nnmodel_forward.1} parent=97 // pred_region
            // Predicated region
            $region103: #{nnmodel_forward.1} parent=101 // pred_check
              _
            $region104: #{nnmodel_forward.1} parent=101 // pred_check_branch
              %407 = sbr.rel (0) target = $region106
            $region105: #{nnmodel_forward.1} parent=101 // pred_region
              // Predicated region
              $region118: #{nnmodel_forward.1} parent=105 // pred_check
                _
              $region119: #{nnmodel_forward.1} parent=105 // pred_check_branch
                %425 = sbr.rel (0) target = $region121
              $region120: #{nnmodel_forward.1} parent=105 // pred_region
                loop: start=0, step=1, limit=1
                $region122: #{nnmodel_forward.1} parent=120 // loop_pre_header
                  _
                $region123: #{nnmodel_forward.1} parent=120 // loop_header
                  %s427 = sphi 0, %s431
                  %p428 = scmp.ge.s32.totalorder %s427, 1
                  %s432 = sphi %s398, %s398
                  %s433 = sphi %s403, %s403
                $region124: #{nnmodel_forward.1} parent=120 // loop_header_branch
                  %430 = sbr.rel (%p428) target = $region128
                $region125: #{nnmodel_forward.1} parent=120 // loop_body
                  %v434 = vld [vmem:[%s432] sm:$0xff]
                  %435 = vst [vmem:[%s433] sm:$0xff] %v434
                  %v436 = vld [vmem:[%s432 + $0x8] sm:$0xff]
                  %437 = vst [vmem:[%s433 + $0x18] sm:$0xff] %v436
                $region126: #{nnmodel_forward.1} parent=120 // loop_footer
                  %s431 = sadd.s32 1, %s427
                $region127: #{nnmodel_forward.1} parent=120 // loop_footer_branch
                  %426 = sbr.rel target = $region123
                $region128: #{nnmodel_forward.1} parent=120 // loop_exit
                  _
              $region121: #{nnmodel_forward.1} parent=105 // pred_fallthru
                _
              // Predicated region
              $region129: #{nnmodel_forward.1} parent=105 // pred_check
                _
              $region130: #{nnmodel_forward.1} parent=105 // pred_check_branch
                %439 = sbr.rel target = $region132
              $region131: #{nnmodel_forward.1} parent=105 // pred_region
                _
              $region132: #{nnmodel_forward.1} parent=105 // pred_fallthru
                _
            $region106: #{nnmodel_forward.1} parent=101 // pred_fallthru
              _
            // Predicated region
            $region107: #{nnmodel_forward.1} parent=101 // pred_check
              _
            $region108: #{nnmodel_forward.1} parent=101 // pred_check_branch
              %409 = sbr.rel target = $region110
            $region109: #{nnmodel_forward.1} parent=101 // pred_region
              %s411 = ssub.s32 256, 1
              loop: start=0, step=1, limit=1
              $region111: #{nnmodel_forward.1} parent=109 // loop_pre_header
                _
              $region112: #{nnmodel_forward.1} parent=109 // loop_header
                %s413 = sphi 0, %s417
                %p414 = scmp.ge.s32.totalorder %s413, 1
                %s418 = sphi %s398, %s398
                %s419 = sphi %s403, %s403
              $region113: #{nnmodel_forward.1} parent=109 // loop_header_branch
                %416 = sbr.rel (%p414) target = $region117
              $region114: #{nnmodel_forward.1} parent=109 // loop_body
                %v420 = vld [vmem:[%s418] sm:%s411]
                %421 = vst [vmem:[%s419] sm:%s411] %v420
                %v422 = vld [vmem:[%s418 + $0x8] sm:%s411]
                %423 = vst [vmem:[%s419 + $0x18] sm:%s411] %v422
              $region115: #{nnmodel_forward.1} parent=109 // loop_footer
                %s417 = sadd.s32 1, %s413
              $region116: #{nnmodel_forward.1} parent=109 // loop_footer_branch
                %412 = sbr.rel target = $region112
              $region117: #{nnmodel_forward.1} parent=109 // loop_exit
                _
            $region110: #{nnmodel_forward.1} parent=101 // pred_fallthru
              _
          $region102: #{nnmodel_forward.1} parent=97 // pred_fallthru
            _
          %440 = vnop
        $region98: #{nnmodel_forward.1} parent=73 // pred_fallthru
          _
      $region74: #{nnmodel_forward.1} parent=5 // pred_fallthru
        _
      %p441 = scmp.le.s32.totalorder 2, %s14
      // Predicated region
      $region133: #{nnmodel_forward.1} parent=5 // pred_check
        %p442 = pneg %p441
      $region134: #{nnmodel_forward.1} parent=5 // pred_check_branch
        %444 = sbr.rel (%p442) target = $region136
      $region135: #{nnmodel_forward.1} parent=5 // pred_region
        %s445 = ssub.s32 %s14, 2
        // Predicated region
        $region137: #{nnmodel_forward.1} parent=135 // pred_check
          %p446 = pneg %p153
        $region138: #{nnmodel_forward.1} parent=135 // pred_check_branch
          %448 = sbr.rel (%p446) target = $region140
        $region139: #{nnmodel_forward.1} parent=135 // pred_region
          %s449 = sand.u32 %s138, 1
          %s450 = sand.u32 %s138, 1
          %s451 = smul.addr %s450, 16
          %s452 = scalar_lea.vmem [#allocation10], %s451
        $region140: #{nnmodel_forward.1} parent=135 // pred_fallthru
          _
      $region136: #{nnmodel_forward.1} parent=5 // pred_fallthru
        _
    $region6: #{nnmodel_forward.1} parent=1 // loop_footer
      %s18 = sadd.s32 1, %s14
    $region7: #{nnmodel_forward.1} parent=1 // loop_footer_branch
      %13 = sbr.rel target = $region3
    $region8: #{nnmodel_forward.1} parent=1 // loop_exit
      _
    %453 = vsyncpa [#allocation3], 1
    %s454 = scalar_lea.sflag [#allocation3], 1
    %455 = vsyncpa %s454, 1
    %456 = vsyncpa [#allocation5], 1
    %457 = vsyncpa [#allocation8], 1

</llo_original>
